<compile_context>
chip_gen: v7x
topology: tpu7x:2x2x1
jax: 0.10.0
libtpu: 0.0.40
codegen_flags: <defaults>
</compile_context>

<pallas_src>
import math

import numpy as np
import jax
import jax.numpy as jnp
from jax.experimental import pallas as pl
from jax.experimental.pallas import tpu as pltpu


def _gfp_kernel(x_ref, w_ref, out_ref):
    """x_ref: (TB, k) time steps, w_ref: (1, H) = 2*pi*W, out_ref: (TB, k*2H).

    Each of the k packed time steps owns a contiguous [sin | cos] group of
    2H lanes in the output row (k == 1 when 2H is already a multiple of 128).
    Rank-1 outer product stays a VPU broadcast-multiply (no K=1 MXU use).
    """
    k = x_ref.shape[1]
    half = w_ref.shape[1]
    xv = x_ref[...]                      # (TB, k)
    w = w_ref[...]                       # (1, H), 2*pi already folded in
    for i in range(k):                   # static unroll; k is 1..8
        phase = xv[:, i:i + 1] * w       # (TB, H) broadcast outer product (VPU)
        base = 2 * half * i
        out_ref[:, base:base + half] = jnp.sin(phase).astype(out_ref.dtype)
        out_ref[:, base + half:base + 2 * half] = jnp.cos(phase).astype(out_ref.dtype)


def _sublane_align(out_dtype):
    # Output-block row alignment: 8 rows (4-byte), 16 (2-byte), 32 (1-byte).
    return max(8, 32 // jnp.dtype(out_dtype).itemsize)


def _rows_per_block(rows, row_bytes, align, *, target_bytes=6 << 20, max_rows=8192):
    """Rows per output block: `align`-aligned, ~target_bytes per block, and at
    least 2 grid steps whenever the batch allows it (v7x TensorCore sharding)."""
    cap = (target_bytes // max(row_bytes, 1)) // align * align
    cap = max(align, min(max_rows, cap))
    if rows > cap:
        return cap
    if rows >= 2 * align:
        half_rows = -(-rows // 2)                       # ceil(rows / 2)
        return min(cap, -(-half_rows // align) * align)  # round up to alignment
    return rows  # single block; block dim == full array dim is always legal


def gaussian_fourier_projection(x, W, *, out_dtype=jnp.float32):
    """x: (B,), W: (embed_dim//2,) -> (B, embed_dim) = [sin(2*pi*x*W), cos(2*pi*x*W)]."""
    B = int(x.shape[0])
    H = int(W.shape[0])
    two_h = 2 * H
    out_dtype = jnp.dtype(out_dtype)
    itemsize = out_dtype.itemsize
    align = _sublane_align(out_dtype)

    # Fold 2*pi into the fixed (untrained) feature row once; one resident constant.
    w2pi = (W.astype(jnp.float32) * np.float32(2.0 * np.pi)).reshape(1, H)

    # Lane-density packing for small embed_dim: pack k time steps per stored row
    # so the output block's last dim is a multiple of the 128-lane vreg width.
    k = 1
    if two_h % 128 != 0:
        k_cand = 128 // math.gcd(two_h, 128)
        if k_cand <= 8 and B % k_cand == 0:
            k = k_cand
    rows = B // k
    row_elems = k * two_h

    x2 = x.astype(jnp.float32).reshape(rows, k)

    tb = _rows_per_block(rows, row_elems * itemsize, align)
    grid = (pl.cdiv(rows, tb),)   # last block may be partial; writeback is masked

    # VMEM budget: 2x double-buffered output block + 2x (tb, k) x block (which
    # lane-pads to 128 lanes in VMEM) + the resident w row.  Stays well under
    # v7x's 64 MiB physical VMEM; 48 MiB ceiling also lifts v5e's 16 MiB default.
    out_block_bytes = tb * row_elems * itemsize
    x_block_bytes = tb * 128 * 4
    need = 2 * out_block_bytes + 2 * x_block_bytes + (1 << 20)
    vmem_limit = int(min(48 << 20, max(32 << 20, need)))

    cost = pl.CostEstimate(
        flops=2 * B * two_h,            # one broadcast-mul (+ cast) per element
        transcendentals=B * two_h,      # one sin/cos per output element
        bytes_accessed=B * 4 + H * 4 + B * two_h * itemsize,
    )

    out = pl.pallas_call(
        _gfp_kernel,
        out_shape=jax.ShapeDtypeStruct((rows, row_elems), out_dtype),
        grid=grid,
        in_specs=[
            pl.BlockSpec((tb, k), lambda i: (i, 0)),   # batch-tiled time steps
            pl.BlockSpec((1, H), lambda i: (0, 0)),    # resident 2*pi*W row
        ],
        out_specs=pl.BlockSpec((tb, row_elems), lambda i: (i, 0)),
        compiler_params=pltpu.CompilerParams(
            dimension_semantics=("parallel",),         # batch sharding on v7x
            vmem_limit_bytes=vmem_limit,
        ),
        cost_estimate=cost,
    )(x2, w2pi)

    # Row-major (rows, k*2H) -> (B, 2H) merge of leading dims is a free reshape.
    return out.reshape(B, two_h) if k > 1 else out


def _reference(x, W):
    w2 = W.astype(jnp.float32) * np.float32(2.0 * np.pi)
    proj = x.astype(jnp.float32)[:, None] * w2[None, :]
    return jnp.concatenate([jnp.sin(proj), jnp.cos(proj)], axis=-1)


if __name__ == "__main__":
    key = jax.random.PRNGKey(0)
    k_w1, k_x1, k_w2, k_x2, k_w3, k_x3 = jax.random.split(key, 6)
    scale = 30.0

    # Config A: tiny embed_dim (2H = 32 < 128) -> exercises the lane-packing path.
    W_a = jax.random.normal(k_w1, (32 // 2,), dtype=jnp.float32) * scale
    x_a = jax.random.uniform(k_x1, (8,), dtype=jnp.float32)
    out_a = jax.block_until_ready(gaussian_fourier_projection(x_a, W_a))
    assert out_a.shape == (8, 32) and out_a.dtype == jnp.float32
    np.testing.assert_allclose(np.asarray(out_a), np.asarray(_reference(x_a, W_a)),
                               rtol=1e-5, atol=1e-4)

    # Config B: lane-dense embed_dim (2H = 256), ragged batch -> partial last block,
    # two grid steps (no pad / no output slice).
    W_b = jax.random.normal(k_w2, (256 // 2,), dtype=jnp.float32) * scale
    x_b = jax.random.uniform(k_x2, (24,), dtype=jnp.float32)
    out_b = jax.block_until_ready(gaussian_fourier_projection(x_b, W_b))
    assert out_b.shape == (24, 256)
    np.testing.assert_allclose(np.asarray(out_b), np.asarray(_reference(x_b, W_b)),
                               rtol=1e-5, atol=1e-4)

    # Config C: bfloat16 output (halves writeback bytes; 16-row sublane alignment).
    W_c = jax.random.normal(k_w3, (128 // 2,), dtype=jnp.float32) * scale
    x_c = jax.random.uniform(k_x3, (40,), dtype=jnp.float32)
    out_c = jax.block_until_ready(
        gaussian_fourier_projection(x_c, W_c, out_dtype=jnp.bfloat16))
    assert out_c.shape == (40, 128) and out_c.dtype == jnp.bfloat16
    np.testing.assert_allclose(np.asarray(out_c.astype(jnp.float32)),
                               np.asarray(_reference(x_c, W_c)),
                               rtol=0.0, atol=1e-2)

    print("KERNEL_OK")
</pallas_src>

<mosaic_0001>
module attributes {stable_mosaic.version = 11 : i64} {
  func.func @_gfp_kernel(%arg0: i32, %arg1: memref<2x4xf32, #tpu.memory_space<vmem>>, %arg2: memref<1x16xf32, #tpu.memory_space<vmem>>, %arg3: memref<2x128xf32, #tpu.memory_space<vmem>>) attributes {dimension_semantics = [#tpu.dimension_semantics<parallel>], iteration_bounds = array<i64: 1>, scalar_prefetch = 0 : i64, scratch_operands = 0 : i64, tpu.core_type = #tpu.core_type<tc>, window_params = [{transform_indices = @transform_0, window_bounds = array<i64: 2, 4>}, {pipeline_mode = #tpu.pipeline_mode<synchronous>, transform_indices = @transform_1, window_bounds = array<i64: 1, 16>}, {transform_indices = @transform_2, window_bounds = array<i64: 2, 128>}]} {
    %c0 = arith.constant 0 : index
    %c0_0 = arith.constant 0 : index
    %0 = vector.load %arg1[%c0, %c0_0] : memref<2x4xf32, #tpu.memory_space<vmem>>, vector<2x4xf32>
    %c0_1 = arith.constant 0 : index
    %c0_2 = arith.constant 0 : index
    %1 = vector.load %arg2[%c0_1, %c0_2] : memref<1x16xf32, #tpu.memory_space<vmem>>, vector<1x16xf32>
    %2 = vector.extract_strided_slice %0 {offsets = [0, 0], sizes = [2, 1], strides = [1, 1]} : vector<2x4xf32> to vector<2x1xf32>
    %3 = vector.broadcast %2 : vector<2x1xf32> to vector<2x16xf32>
    %4 = vector.broadcast %1 : vector<1x16xf32> to vector<2x16xf32>
    %5 = arith.mulf %3, %4 : vector<2x16xf32>
    %6 = math.sin %5 : vector<2x16xf32>
    %c0_3 = arith.constant 0 : index
    %c0_4 = arith.constant 0 : index
    %7 = vector.load %arg3[%c0_3, %c0_4] : memref<2x128xf32, #tpu.memory_space<vmem>>, vector<2x16xf32>
    tpu.vector_store %arg3[%c0_3, %c0_4], %6 {strides = array<i32>} : memref<2x128xf32, #tpu.memory_space<vmem>>, vector<2x16xf32>,
    %8 = math.cos %5 : vector<2x16xf32>
    %c0_5 = arith.constant 0 : index
    %c16 = arith.constant 16 : index
    %9 = vector.load %arg3[%c0_5, %c16] : memref<2x128xf32, #tpu.memory_space<vmem>>, vector<2x16xf32>
    tpu.vector_store %arg3[%c0_5, %c16], %8 {strides = array<i32>} : memref<2x128xf32, #tpu.memory_space<vmem>>, vector<2x16xf32>,
    %10 = vector.extract_strided_slice %0 {offsets = [0, 1], sizes = [2, 1], strides = [1, 1]} : vector<2x4xf32> to vector<2x1xf32>
    %11 = vector.broadcast %10 : vector<2x1xf32> to vector<2x16xf32>
    %12 = vector.broadcast %1 : vector<1x16xf32> to vector<2x16xf32>
    %13 = arith.mulf %11, %12 : vector<2x16xf32>
    %14 = math.sin %13 : vector<2x16xf32>
    %c0_6 = arith.constant 0 : index
    %c32 = arith.constant 32 : index
    %15 = vector.load %arg3[%c0_6, %c32] : memref<2x128xf32, #tpu.memory_space<vmem>>, vector<2x16xf32>
    tpu.vector_store %arg3[%c0_6, %c32], %14 {strides = array<i32>} : memref<2x128xf32, #tpu.memory_space<vmem>>, vector<2x16xf32>,
    %16 = math.cos %13 : vector<2x16xf32>
    %c0_7 = arith.constant 0 : index
    %c48 = arith.constant 48 : index
    %17 = vector.load %arg3[%c0_7, %c48] : memref<2x128xf32, #tpu.memory_space<vmem>>, vector<2x16xf32>
    tpu.vector_store %arg3[%c0_7, %c48], %16 {strides = array<i32>} : memref<2x128xf32, #tpu.memory_space<vmem>>, vector<2x16xf32>,
    %18 = vector.extract_strided_slice %0 {offsets = [0, 2], sizes = [2, 1], strides = [1, 1]} : vector<2x4xf32> to vector<2x1xf32>
    %19 = vector.broadcast %18 : vector<2x1xf32> to vector<2x16xf32>
    %20 = vector.broadcast %1 : vector<1x16xf32> to vector<2x16xf32>
    %21 = arith.mulf %19, %20 : vector<2x16xf32>
    %22 = math.sin %21 : vector<2x16xf32>
    %c0_8 = arith.constant 0 : index
    %c64 = arith.constant 64 : index
    %23 = vector.load %arg3[%c0_8, %c64] : memref<2x128xf32, #tpu.memory_space<vmem>>, vector<2x16xf32>
    tpu.vector_store %arg3[%c0_8, %c64], %22 {strides = array<i32>} : memref<2x128xf32, #tpu.memory_space<vmem>>, vector<2x16xf32>,
    %24 = math.cos %21 : vector<2x16xf32>
    %c0_9 = arith.constant 0 : index
    %c80 = arith.constant 80 : index
    %25 = vector.load %arg3[%c0_9, %c80] : memref<2x128xf32, #tpu.memory_space<vmem>>, vector<2x16xf32>
    tpu.vector_store %arg3[%c0_9, %c80], %24 {strides = array<i32>} : memref<2x128xf32, #tpu.memory_space<vmem>>, vector<2x16xf32>,
    %26 = vector.extract_strided_slice %0 {offsets = [0, 3], sizes = [2, 1], strides = [1, 1]} : vector<2x4xf32> to vector<2x1xf32>
    %27 = vector.broadcast %26 : vector<2x1xf32> to vector<2x16xf32>
    %28 = vector.broadcast %1 : vector<1x16xf32> to vector<2x16xf32>
    %29 = arith.mulf %27, %28 : vector<2x16xf32>
    %30 = math.sin %29 : vector<2x16xf32>
    %c0_10 = arith.constant 0 : index
    %c96 = arith.constant 96 : index
    %31 = vector.load %arg3[%c0_10, %c96] : memref<2x128xf32, #tpu.memory_space<vmem>>, vector<2x16xf32>
    tpu.vector_store %arg3[%c0_10, %c96], %30 {strides = array<i32>} : memref<2x128xf32, #tpu.memory_space<vmem>>, vector<2x16xf32>,
    %32 = math.cos %29 : vector<2x16xf32>
    %c0_11 = arith.constant 0 : index
    %c112 = arith.constant 112 : index
    %33 = vector.load %arg3[%c0_11, %c112] : memref<2x128xf32, #tpu.memory_space<vmem>>, vector<2x16xf32>
    tpu.vector_store %arg3[%c0_11, %c112], %32 {strides = array<i32>} : memref<2x128xf32, #tpu.memory_space<vmem>>, vector<2x16xf32>,
    return
  }
  func.func @transform_0(%arg0: i32) -> (i32, i32) {
    %c0_i32 = arith.constant 0 : i32
    %c0_i32_0 = arith.constant 0 : i32
    return %arg0, %c0_i32 : i32, i32
  }
  func.func @transform_1(%arg0: i32) -> (i32, i32) {
    %c0_i32 = arith.constant 0 : i32
    %c0_i32_0 = arith.constant 0 : i32
    %c0_i32_1 = arith.constant 0 : i32
    return %c0_i32, %c0_i32_0 : i32, i32
  }
  func.func @transform_2(%arg0: i32) -> (i32, i32) {
    %c0_i32 = arith.constant 0 : i32
    %c0_i32_0 = arith.constant 0 : i32
    return %arg0, %c0_i32 : i32, i32
  }
}

</mosaic_0001>

<llo_original>
// kernel: tpu_custom_call.1
$region0: #{tpu_custom_call.1}
  #allocation0 [shape = 'u32[]', space=smem, size = 0x4, offset = 0x4, fixed_abs, tag = 'smem constant byte address 0x4 - core index']
  #allocation1 [shape = 'u32[144,128]{1,0:T(1,128)}', space=vmem, size = 0x12000, scoped, tag = 'internal scratch']
  %s0 = inlined_call_operand.hbm [shape: f32[2,4], index: 0, kind: input, shape index: {}]
  %s1 = inlined_call_operand.vmem [shape: f32[1,16], index: 1, kind: input, shape index: {}]
  %s2 = inlined_call_operand.hbm [shape: f32[2,128], index: 2, kind: output, shape index: {}]
  %s3 = sld [smem:[#allocation0]]
  $region22: #{tpu_custom_call.1} parent=0
    _
  %s5 = ssub.s32 1, %s3
  %s6 = scalar_select 0, %s5, %s3
  $region1: #{tpu_custom_call.1} parent=0
    #allocation2 [shape = 'u8[1024]{0}', space=vmem, size = 0x400, scoped, tag = 'input window, operand 0, single buffered']
    #allocation3 [shape = 's32[1]{0}', space=sflag, size = 0x4, scoped, tag = 'scoped memory for tpu_custom_call.1']
    #allocation4 [shape = 's32[1]{0}', space=sflag, size = 0x4, scoped, tag = 'scoped memory for tpu_custom_call.1']
    #allocation5 [shape = 'u8[1024]{0}', space=vmem, size = 0x400, scoped, tag = 'output window, operand 0, single buffered']
    %7 = vsyncpa [#allocation3], 0
    %8 = vsyncpa [#allocation4], 0
    // Predicated region
    $region2: #{tpu_custom_call.1} parent=1 // pred_check
      _
    $region3: #{tpu_custom_call.1} parent=1 // pred_check_branch
      %10 = sbr.rel (0) target = $region5
    $region4: #{tpu_custom_call.1} parent=1 // pred_region
      %s12 = ssub.s32 32, 32
      %13 = vsyncadd [#allocation3], %s12
      %s15 = sshll.u32 [#allocation2], 4
      %s16 = int_to_ptr.vmem [resolvable:$true] %s15
      %18 = dma.hbm_to_vmem [thread:$0]  %s0, 32, %s16, [#allocation3]
    $region5: #{tpu_custom_call.1} parent=1 // pred_fallthru
      _
    // Predicated region
    $region6: #{tpu_custom_call.1} parent=1 // pred_check
      _
    $region7: #{tpu_custom_call.1} parent=1 // pred_check_branch
      %20 = sbr.rel (0) target = $region9
    $region8: #{tpu_custom_call.1} parent=1 // pred_region
      _
    $region9: #{tpu_custom_call.1} parent=1 // pred_fallthru
      _
    // Predicated region
    $region10: #{tpu_custom_call.1} parent=1 // pred_check
      _
    $region11: #{tpu_custom_call.1} parent=1 // pred_check_branch
      %22 = sbr.rel (0) target = $region13
    $region12: #{tpu_custom_call.1} parent=1 // pred_region
      %23 = dma.done [#allocation3], 32
    $region13: #{tpu_custom_call.1} parent=1 // pred_fallthru
      _
    %v24 = vld [vmem:[#allocation2] sm:$0x3]
    %v25 = vld [vmem:[%s1] sm:$0x1]
    %27 = vset.pattern.permute.xlu0 0
    %28 = vperm.xlu0 %27, %v24
    %v29 = vpop.permute.xlu0 %28
    %v32 = vlaneseq
    %v33 = vshrl.u32 %v32, 7
    %v34 = vsub.s32 0, %v33
    %v35 = vrot.slane %v25, %v34
    %v37 = vmul.f32 %v29, %v35
    %v38 = vand.u32 2147483647, %v37
    %vm39 = vcmp.le.f32.partialorder %v38, 0.7853982
    %vm40 = vcmp.lt.s32.totalorder %v37, 0
    %v41 = vand.u32 %v37, 2139095040
    %v42 = vshrl.u32 %v41, 23
    %v43 = vsub.s32 %v42, 127
    %v44 = vand.u32 2147483647, %v37
    %v45 = vand.u32 %v44, 8388607
    %v46 = vor.u32 %v45, 8388608
    %v47 = vsub.s32 0, %v46
    %v48 = vadd.s32 %v43, 1
    %vm49 = vcmp.gt.s32.totalorder %v48, 0
    %v50 = vsel %vm49, %v48, 0
    %v51 = vshrl.u32 %v50, 5
    %v52 = vand.u32 %v50, 31
    %v53 = vsub.s32 32, %v52
    %v54 = vshrl.u32 683565275, %v53
    %v55 = vshll.u32 683565275, %v52
    %v56 = vshrl.u32 2475754826, %v53
    %v57 = vor.u32 %v55, %v56
    %v58 = vshll.u32 2475754826, %v52
    %v59 = vshrl.u32 2131351028, %v53
    %v60 = vor.u32 %v58, %v59
    %v61 = vshll.u32 2131351028, %v52
    %v62 = vshrl.u32 2102212464, %v53
    %v63 = vor.u32 %v61, %v62
    %v64 = vshll.u32 2102212464, %v52
    %v65 = vshrl.u32 920167782, %v53
    %v66 = vor.u32 %v64, %v65
    %v67 = vshll.u32 920167782, %v52
    %v68 = vshrl.u32 1326507024, %v53
    %v69 = vor.u32 %v67, %v68
    %vm70 = vcmp.lt.s32.totalorder %v51, 1
    %vm71 = vcmp.lt.s32.totalorder %v51, 2
    %vm72 = vcmp.lt.s32.totalorder %v51, 3
    %vm73 = vcmp.lt.s32.totalorder %v51, 4
    %v74 = vsel %vm70, %v54, %v57
    %v75 = vsel %vm73, %v63, 2102212464
    %v76 = vsel %vm72, %v60, %v75
    %v77 = vsel %vm71, %v74, %v76
    %v78 = vsel %vm70, %v57, %v60
    %v79 = vsel %vm73, %v66, 920167782
    %v80 = vsel %vm72, %v63, %v79
    %v81 = vsel %vm71, %v78, %v80
    %v82 = vsel %vm70, %v60, %v63
    %v83 = vsel %vm73, %v69, 1326507024
    %v84 = vsel %vm72, %v66, %v83
    %v85 = vsel %vm71, %v82, %v84
    %v86 = vshll.u32 %v46, 8
    %v87 = vmul.u32.u64.compose %v86, %v85
    %v88 = vextract.low.u32 %v87
    %v89 = vextract.high.u32 %v87
    %v90 = vmul.u32.u64.compose %v86, %v81
    %v91 = vextract.low.u32 %v90
    %v92 = vextract.high.u32 %v90
    %v93 = vmul.u32 %v86, %v77
    %v94 = vadd.s32 %v89, %v91
    %vm95 = vc.u32 %v89, %v91
    %v96 = vadd.s32 %v92, 1
    %v97 = vsel %vm95, %v96, %v92
    %v98 = vadd.s32 %v93, %v97
    %v99 = vadd.s32 %v98, 536870912
    %v100 = vshrl.u32 %v99, 30
    %v101 = vshll.u32 %v100, 30
    %v102 = vsub.s32 %v98, %v101
    %vm103 = vcmp.lt.s32.totalorder %v102, 0
    %v104 = vsub.s32 0, %v102
    %v105 = vsel %vm103, %v104, %v102
    %v106 = vclz %v105
    %v107 = vsub.s32 %v106, 2
    %vm108 = vcmp.gt.s32.totalorder 0, %v107
    %v109 = vsel %vm108, 0, %v107
    %v110 = vsub.s32 32, %v109
    %v111 = vshll.u32 %v102, %v109
    %v112 = vshrl.u32 %v94, %v110
    %v113 = vor.u32 %v111, %v112
    %v114 = vsub.s32 4294967266, %v109
    %v115 = vadd.s32 %v114, 127
    %v116 = vshll.u32 %v115, 23
    %v117 = vor.u32 4788187, %v116
    %v118 = vand.u32 2147483647, %v117
    %v120 = vcvt.s32.f32 %v113
    %v121 = vmul.f32 %v120, %v118
    %v122 = vxor.u32 %v121, 2147483648
    %v123 = vsel %vm40, %v122, %v121
    %v124 = vsub.s32 4, %v100
    %v125 = vsel %vm40, %v124, %v100
    %v126 = vsel %vm39, %v37, %v123
    %v127 = vsel %vm39, 0, %v125
    %v128 = vcosq.f32.pop %v126
    %v129 = vsinq.f32.pop %v126
    %vm130 = vweird.f32 %v37
    %v131 = vadd.s32 %v127, 3
    %v132 = vand.u32 %v131, 3
    %vm133 = vcmp.lt.s32.totalorder %v132, 2
    %vm134 = vcmp.eq.s32.totalorder %v132, 0
    %v135 = vxor.u32 %v129, 2147483648
    %v136 = vsel %vm134, %v128, %v135
    %vm137 = vcmp.eq.s32.totalorder %v132, 2
    %v138 = vxor.u32 %v128, 2147483648
    %v139 = vsel %vm137, %v138, %v129
    %v140 = vsel %vm133, %v136, %v139
    %v141 = vsel %vm130, nan, %v140
    %vm142 = vcmask 123904
    %143 = vst.msk [vmem:[#allocation5] sm:$0x3] %vm142, %v141
    %v144 = vand.u32 2147483647, %v37
    %vm145 = vcmp.le.f32.partialorder %v144, 0.7853982
    %vm146 = vcmp.lt.s32.totalorder %v37, 0
    %v147 = vand.u32 %v37, 2139095040
    %v148 = vshrl.u32 %v147, 23
    %v149 = vsub.s32 %v148, 127
    %v150 = vand.u32 2147483647, %v37
    %v151 = vand.u32 %v150, 8388607
    %v152 = vor.u32 %v151, 8388608
    %v153 = vsub.s32 0, %v152
    %v154 = vadd.s32 %v149, 1
    %vm155 = vcmp.gt.s32.totalorder %v154, 0
    %v156 = vsel %vm155, %v154, 0
    %v157 = vshrl.u32 %v156, 5
    %v158 = vand.u32 %v156, 31
    %v159 = vsub.s32 32, %v158
    %v160 = vshrl.u32 683565275, %v159
    %v161 = vshll.u32 683565275, %v158
    %v162 = vshrl.u32 2475754826, %v159
    %v163 = vor.u32 %v161, %v162
    %v164 = vshll.u32 2475754826, %v158
    %v165 = vshrl.u32 2131351028, %v159
    %v166 = vor.u32 %v164, %v165
    %v167 = vshll.u32 2131351028, %v158
    %v168 = vshrl.u32 2102212464, %v159
    %v169 = vor.u32 %v167, %v168
    %v170 = vshll.u32 2102212464, %v158
    %v171 = vshrl.u32 920167782, %v159
    %v172 = vor.u32 %v170, %v171
    %v173 = vshll.u32 920167782, %v158
    %v174 = vshrl.u32 1326507024, %v159
    %v175 = vor.u32 %v173, %v174
    %vm176 = vcmp.lt.s32.totalorder %v157, 1
    %vm177 = vcmp.lt.s32.totalorder %v157, 2
    %vm178 = vcmp.lt.s32.totalorder %v157, 3
    %vm179 = vcmp.lt.s32.totalorder %v157, 4
    %v180 = vsel %vm176, %v160, %v163
    %v181 = vsel %vm179, %v169, 2102212464
    %v182 = vsel %vm178, %v166, %v181
    %v183 = vsel %vm177, %v180, %v182
    %v184 = vsel %vm176, %v163, %v166
    %v185 = vsel %vm179, %v172, 920167782
    %v186 = vsel %vm178, %v169, %v185
    %v187 = vsel %vm177, %v184, %v186
    %v188 = vsel %vm176, %v166, %v169
    %v189 = vsel %vm179, %v175, 1326507024
    %v190 = vsel %vm178, %v172, %v189
    %v191 = vsel %vm177, %v188, %v190
    %v192 = vshll.u32 %v152, 8
    %v193 = vmul.u32.u64.compose %v192, %v191
    %v194 = vextract.low.u32 %v193
    %v195 = vextract.high.u32 %v193
    %v196 = vmul.u32.u64.compose %v192, %v187
    %v197 = vextract.low.u32 %v196
    %v198 = vextract.high.u32 %v196
    %v199 = vmul.u32 %v192, %v183
    %v200 = vadd.s32 %v195, %v197
    %vm201 = vc.u32 %v195, %v197
    %v202 = vadd.s32 %v198, 1
    %v203 = vsel %vm201, %v202, %v198
    %v204 = vadd.s32 %v199, %v203
    %v205 = vadd.s32 %v204, 536870912
    %v206 = vshrl.u32 %v205, 30
    %v207 = vshll.u32 %v206, 30
    %v208 = vsub.s32 %v204, %v207
    %vm209 = vcmp.lt.s32.totalorder %v208, 0
    %v210 = vsub.s32 0, %v208
    %v211 = vsel %vm209, %v210, %v208
    %v212 = vclz %v211
    %v213 = vsub.s32 %v212, 2
    %vm214 = vcmp.gt.s32.totalorder 0, %v213
    %v215 = vsel %vm214, 0, %v213
    %v216 = vsub.s32 32, %v215
    %v217 = vshll.u32 %v208, %v215
    %v218 = vshrl.u32 %v200, %v216
    %v219 = vor.u32 %v217, %v218
    %v220 = vsub.s32 4294967266, %v215
    %v221 = vadd.s32 %v220, 127
    %v222 = vshll.u32 %v221, 23
    %v223 = vor.u32 4788187, %v222
    %v224 = vand.u32 2147483647, %v223
    %v226 = vcvt.s32.f32 %v219
    %v227 = vmul.f32 %v226, %v224
    %v228 = vxor.u32 %v227, 2147483648
    %v229 = vsel %vm146, %v228, %v227
    %v230 = vsub.s32 4, %v206
    %v231 = vsel %vm146, %v230, %v206
    %v232 = vsel %vm145, %v37, %v229
    %v233 = vsel %vm145, 0, %v231
    %v234 = vcosq.f32.pop %v232
    %v235 = vsinq.f32.pop %v232
    %vm236 = vweird.f32 %v37
    %v237 = vand.u32 %v233, 3
    %vm238 = vcmp.lt.s32.totalorder %v237, 2
    %vm239 = vcmp.eq.s32.totalorder %v237, 0
    %v240 = vxor.u32 %v235, 2147483648
    %v241 = vsel %vm239, %v234, %v240
    %vm242 = vcmp.eq.s32.totalorder %v237, 2
    %v243 = vxor.u32 %v234, 2147483648
    %v244 = vsel %vm242, %v243, %v235
    %v245 = vsel %vm238, %v241, %v244
    %v246 = vsel %vm236, nan, %v245
    %248 = vrot.lane.b32.xlu0 %v246, 16
    %v249 = vpop.permute.xlu0 %248
    %vm251 = vcmask 255104
    %252 = vst.msk [vmem:[#allocation5] sm:$0x3] %vm251, %v249
    %253 = vset.pattern.permute.xlu0 1
    %254 = vperm.xlu0 %253, %v24
    %v255 = vpop.permute.xlu0 %254
    %v257 = vmul.f32 %v255, %v35
    %v258 = vand.u32 2147483647, %v257
    %vm259 = vcmp.le.f32.partialorder %v258, 0.7853982
    %vm260 = vcmp.lt.s32.totalorder %v257, 0
    %v261 = vand.u32 %v257, 2139095040
    %v262 = vshrl.u32 %v261, 23
    %v263 = vsub.s32 %v262, 127
    %v264 = vand.u32 2147483647, %v257
    %v265 = vand.u32 %v264, 8388607
    %v266 = vor.u32 %v265, 8388608
    %v267 = vsub.s32 0, %v266
    %v268 = vadd.s32 %v263, 1
    %vm269 = vcmp.gt.s32.totalorder %v268, 0
    %v270 = vsel %vm269, %v268, 0
    %v271 = vshrl.u32 %v270, 5
    %v272 = vand.u32 %v270, 31
    %v273 = vsub.s32 32, %v272
    %v274 = vshrl.u32 683565275, %v273
    %v275 = vshll.u32 683565275, %v272
    %v276 = vshrl.u32 2475754826, %v273
    %v277 = vor.u32 %v275, %v276
    %v278 = vshll.u32 2475754826, %v272
    %v279 = vshrl.u32 2131351028, %v273
    %v280 = vor.u32 %v278, %v279
    %v281 = vshll.u32 2131351028, %v272
    %v282 = vshrl.u32 2102212464, %v273
    %v283 = vor.u32 %v281, %v282
    %v284 = vshll.u32 2102212464, %v272
    %v285 = vshrl.u32 920167782, %v273
    %v286 = vor.u32 %v284, %v285
    %v287 = vshll.u32 920167782, %v272
    %v288 = vshrl.u32 1326507024, %v273
    %v289 = vor.u32 %v287, %v288
    %vm290 = vcmp.lt.s32.totalorder %v271, 1
    %vm291 = vcmp.lt.s32.totalorder %v271, 2
    %vm292 = vcmp.lt.s32.totalorder %v271, 3
    %vm293 = vcmp.lt.s32.totalorder %v271, 4
    %v294 = vsel %vm290, %v274, %v277
    %v295 = vsel %vm293, %v283, 2102212464
    %v296 = vsel %vm292, %v280, %v295
    %v297 = vsel %vm291, %v294, %v296
    %v298 = vsel %vm290, %v277, %v280
    %v299 = vsel %vm293, %v286, 920167782
    %v300 = vsel %vm292, %v283, %v299
    %v301 = vsel %vm291, %v298, %v300
    %v302 = vsel %vm290, %v280, %v283
    %v303 = vsel %vm293, %v289, 1326507024
    %v304 = vsel %vm292, %v286, %v303
    %v305 = vsel %vm291, %v302, %v304
    %v306 = vshll.u32 %v266, 8
    %v307 = vmul.u32.u64.compose %v306, %v305
    %v308 = vextract.low.u32 %v307
    %v309 = vextract.high.u32 %v307
    %v310 = vmul.u32.u64.compose %v306, %v301
    %v311 = vextract.low.u32 %v310
    %v312 = vextract.high.u32 %v310
    %v313 = vmul.u32 %v306, %v297
    %v314 = vadd.s32 %v309, %v311
    %vm315 = vc.u32 %v309, %v311
    %v316 = vadd.s32 %v312, 1
    %v317 = vsel %vm315, %v316, %v312
    %v318 = vadd.s32 %v313, %v317
    %v319 = vadd.s32 %v318, 536870912
    %v320 = vshrl.u32 %v319, 30
    %v321 = vshll.u32 %v320, 30
    %v322 = vsub.s32 %v318, %v321
    %vm323 = vcmp.lt.s32.totalorder %v322, 0
    %v324 = vsub.s32 0, %v322
    %v325 = vsel %vm323, %v324, %v322
    %v326 = vclz %v325
    %v327 = vsub.s32 %v326, 2
    %vm328 = vcmp.gt.s32.totalorder 0, %v327
    %v329 = vsel %vm328, 0, %v327
    %v330 = vsub.s32 32, %v329
    %v331 = vshll.u32 %v322, %v329
    %v332 = vshrl.u32 %v314, %v330
    %v333 = vor.u32 %v331, %v332
    %v334 = vsub.s32 4294967266, %v329
    %v335 = vadd.s32 %v334, 127
    %v336 = vshll.u32 %v335, 23
    %v337 = vor.u32 4788187, %v336
    %v338 = vand.u32 2147483647, %v337
    %v340 = vcvt.s32.f32 %v333
    %v341 = vmul.f32 %v340, %v338
    %v342 = vxor.u32 %v341, 2147483648
    %v343 = vsel %vm260, %v342, %v341
    %v344 = vsub.s32 4, %v320
    %v345 = vsel %vm260, %v344, %v320
    %v346 = vsel %vm259, %v257, %v343
    %v347 = vsel %vm259, 0, %v345
    %v348 = vcosq.f32.pop %v346
    %v349 = vsinq.f32.pop %v346
    %vm350 = vweird.f32 %v257
    %v351 = vadd.s32 %v347, 3
    %v352 = vand.u32 %v351, 3
    %vm353 = vcmp.lt.s32.totalorder %v352, 2
    %vm354 = vcmp.eq.s32.totalorder %v352, 0
    %v355 = vxor.u32 %v349, 2147483648
    %v356 = vsel %vm354, %v348, %v355
    %vm357 = vcmp.eq.s32.totalorder %v352, 2
    %v358 = vxor.u32 %v348, 2147483648
    %v359 = vsel %vm357, %v358, %v349
    %v360 = vsel %vm353, %v356, %v359
    %v361 = vsel %vm350, nan, %v360
    %363 = vrot.lane.b32.xlu0 %v361, 32
    %v364 = vpop.permute.xlu0 %363
    %vm366 = vcmask 386304
    %367 = vst.msk [vmem:[#allocation5] sm:$0x3] %vm366, %v364
    %v368 = vand.u32 2147483647, %v257
    %vm369 = vcmp.le.f32.partialorder %v368, 0.7853982
    %vm370 = vcmp.lt.s32.totalorder %v257, 0
    %v371 = vand.u32 %v257, 2139095040
    %v372 = vshrl.u32 %v371, 23
    %v373 = vsub.s32 %v372, 127
    %v374 = vand.u32 2147483647, %v257
    %v375 = vand.u32 %v374, 8388607
    %v376 = vor.u32 %v375, 8388608
    %v377 = vsub.s32 0, %v376
    %v378 = vadd.s32 %v373, 1
    %vm379 = vcmp.gt.s32.totalorder %v378, 0
    %v380 = vsel %vm379, %v378, 0
    %v381 = vshrl.u32 %v380, 5
    %v382 = vand.u32 %v380, 31
    %v383 = vsub.s32 32, %v382
    %v384 = vshrl.u32 683565275, %v383
    %v385 = vshll.u32 683565275, %v382
    %v386 = vshrl.u32 2475754826, %v383
    %v387 = vor.u32 %v385, %v386
    %v388 = vshll.u32 2475754826, %v382
    %v389 = vshrl.u32 2131351028, %v383
    %v390 = vor.u32 %v388, %v389
    %v391 = vshll.u32 2131351028, %v382
    %v392 = vshrl.u32 2102212464, %v383
    %v393 = vor.u32 %v391, %v392
    %v394 = vshll.u32 2102212464, %v382
    %v395 = vshrl.u32 920167782, %v383
    %v396 = vor.u32 %v394, %v395
    %v397 = vshll.u32 920167782, %v382
    %v398 = vshrl.u32 1326507024, %v383
    %v399 = vor.u32 %v397, %v398
    %vm400 = vcmp.lt.s32.totalorder %v381, 1
    %vm401 = vcmp.lt.s32.totalorder %v381, 2
    %vm402 = vcmp.lt.s32.totalorder %v381, 3
    %vm403 = vcmp.lt.s32.totalorder %v381, 4
    %v404 = vsel %vm400, %v384, %v387
    %v405 = vsel %vm403, %v393, 2102212464
    %v406 = vsel %vm402, %v390, %v405
    %v407 = vsel %vm401, %v404, %v406
    %v408 = vsel %vm400, %v387, %v390
    %v409 = vsel %vm403, %v396, 920167782
    %v410 = vsel %vm402, %v393, %v409
    %v411 = vsel %vm401, %v408, %v410
    %v412 = vsel %vm400, %v390, %v393
    %v413 = vsel %vm403, %v399, 1326507024
    %v414 = vsel %vm402, %v396, %v413
    %v415 = vsel %vm401, %v412, %v414
    %v416 = vshll.u32 %v376, 8
    %v417 = vmul.u32.u64.compose %v416, %v415
    %v418 = vextract.low.u32 %v417
    %v419 = vextract.high.u32 %v417
    %v420 = vmul.u32.u64.compose %v416, %v411
    %v421 = vextract.low.u32 %v420
    %v422 = vextract.high.u32 %v420
    %v423 = vmul.u32 %v416, %v407
    %v424 = vadd.s32 %v419, %v421
    %vm425 = vc.u32 %v419, %v421
    %v426 = vadd.s32 %v422, 1
    %v427 = vsel %vm425, %v426, %v422
    %v428 = vadd.s32 %v423, %v427
    %v429 = vadd.s32 %v428, 536870912
    %v430 = vshrl.u32 %v429, 30
    %v431 = vshll.u32 %v430, 30
    %v432 = vsub.s32 %v428, %v431
    %vm433 = vcmp.lt.s32.totalorder %v432, 0
    %v434 = vsub.s32 0, %v432
    %v435 = vsel %vm433, %v434, %v432
    %v436 = vclz %v435
    %v437 = vsub.s32 %v436, 2
    %vm438 = vcmp.gt.s32.totalorder 0, %v437
    %v439 = vsel %vm438, 0, %v437
    %v440 = vsub.s32 32, %v439
    %v441 = vshll.u32 %v432, %v439
    %v442 = vshrl.u32 %v424, %v440
    %v443 = vor.u32 %v441, %v442
    %v444 = vsub.s32 4294967266, %v439
    %v445 = vadd.s32 %v444, 127
    %v446 = vshll.u32 %v445, 23
    %v447 = vor.u32 4788187, %v446
    %v448 = vand.u32 2147483647, %v447
    %v450 = vcvt.s32.f32 %v443
    %v451 = vmul.f32 %v450, %v448
    %v452 = vxor.u32 %v451, 2147483648
    %v453 = vsel %vm370, %v452, %v451
    %v454 = vsub.s32 4, %v430
    %v455 = vsel %vm370, %v454, %v430
    %v456 = vsel %vm369, %v257, %v453
    %v457 = vsel %vm369, 0, %v455
    %v458 = vcosq.f32.pop %v456
    %v459 = vsinq.f32.pop %v456
    %vm460 = vweird.f32 %v257
    %v461 = vand.u32 %v457, 3
    %vm462 = vcmp.lt.s32.totalorder %v461, 2
    %vm463 = vcmp.eq.s32.totalorder %v461, 0
    %v464 = vxor.u32 %v459, 2147483648
    %v465 = vsel %vm463, %v458, %v464
    %vm466 = vcmp.eq.s32.totalorder %v461, 2
    %v467 = vxor.u32 %v458, 2147483648
    %v468 = vsel %vm466, %v467, %v459
    %v469 = vsel %vm462, %v465, %v468
    %v470 = vsel %vm460, nan, %v469
    %472 = vrot.lane.b32.xlu0 %v470, 48
    %v473 = vpop.permute.xlu0 %472
    %vm475 = vcmask 517504
    %476 = vst.msk [vmem:[#allocation5] sm:$0x3] %vm475, %v473
    %477 = vset.pattern.permute.xlu0 2
    %478 = vperm.xlu0 %477, %v24
    %v479 = vpop.permute.xlu0 %478
    %v481 = vmul.f32 %v479, %v35
    %v482 = vand.u32 2147483647, %v481
    %vm483 = vcmp.le.f32.partialorder %v482, 0.7853982
    %vm484 = vcmp.lt.s32.totalorder %v481, 0
    %v485 = vand.u32 %v481, 2139095040
    %v486 = vshrl.u32 %v485, 23
    %v487 = vsub.s32 %v486, 127
    %v488 = vand.u32 2147483647, %v481
    %v489 = vand.u32 %v488, 8388607
    %v490 = vor.u32 %v489, 8388608
    %v491 = vsub.s32 0, %v490
    %v492 = vadd.s32 %v487, 1
    %vm493 = vcmp.gt.s32.totalorder %v492, 0
    %v494 = vsel %vm493, %v492, 0
    %v495 = vshrl.u32 %v494, 5
    %v496 = vand.u32 %v494, 31
    %v497 = vsub.s32 32, %v496
    %v498 = vshrl.u32 683565275, %v497
    %v499 = vshll.u32 683565275, %v496
    %v500 = vshrl.u32 2475754826, %v497
    %v501 = vor.u32 %v499, %v500
    %v502 = vshll.u32 2475754826, %v496
    %v503 = vshrl.u32 2131351028, %v497
    %v504 = vor.u32 %v502, %v503
    %v505 = vshll.u32 2131351028, %v496
    %v506 = vshrl.u32 2102212464, %v497
    %v507 = vor.u32 %v505, %v506
    %v508 = vshll.u32 2102212464, %v496
    %v509 = vshrl.u32 920167782, %v497
    %v510 = vor.u32 %v508, %v509
    %v511 = vshll.u32 920167782, %v496
    %v512 = vshrl.u32 1326507024, %v497
    %v513 = vor.u32 %v511, %v512
    %vm514 = vcmp.lt.s32.totalorder %v495, 1
    %vm515 = vcmp.lt.s32.totalorder %v495, 2
    %vm516 = vcmp.lt.s32.totalorder %v495, 3
    %vm517 = vcmp.lt.s32.totalorder %v495, 4
    %v518 = vsel %vm514, %v498, %v501
    %v519 = vsel %vm517, %v507, 2102212464
    %v520 = vsel %vm516, %v504, %v519
    %v521 = vsel %vm515, %v518, %v520
    %v522 = vsel %vm514, %v501, %v504
    %v523 = vsel %vm517, %v510, 920167782
    %v524 = vsel %vm516, %v507, %v523
    %v525 = vsel %vm515, %v522, %v524
    %v526 = vsel %vm514, %v504, %v507
    %v527 = vsel %vm517, %v513, 1326507024
    %v528 = vsel %vm516, %v510, %v527
    %v529 = vsel %vm515, %v526, %v528
    %v530 = vshll.u32 %v490, 8
    %v531 = vmul.u32.u64.compose %v530, %v529
    %v532 = vextract.low.u32 %v531
    %v533 = vextract.high.u32 %v531
    %v534 = vmul.u32.u64.compose %v530, %v525
    %v535 = vextract.low.u32 %v534
    %v536 = vextract.high.u32 %v534
    %v537 = vmul.u32 %v530, %v521
    %v538 = vadd.s32 %v533, %v535
    %vm539 = vc.u32 %v533, %v535
    %v540 = vadd.s32 %v536, 1
    %v541 = vsel %vm539, %v540, %v536
    %v542 = vadd.s32 %v537, %v541
    %v543 = vadd.s32 %v542, 536870912
    %v544 = vshrl.u32 %v543, 30
    %v545 = vshll.u32 %v544, 30
    %v546 = vsub.s32 %v542, %v545
    %vm547 = vcmp.lt.s32.totalorder %v546, 0
    %v548 = vsub.s32 0, %v546
    %v549 = vsel %vm547, %v548, %v546
    %v550 = vclz %v549
    %v551 = vsub.s32 %v550, 2
    %vm552 = vcmp.gt.s32.totalorder 0, %v551
    %v553 = vsel %vm552, 0, %v551
    %v554 = vsub.s32 32, %v553
    %v555 = vshll.u32 %v546, %v553
    %v556 = vshrl.u32 %v538, %v554
    %v557 = vor.u32 %v555, %v556
    %v558 = vsub.s32 4294967266, %v553
    %v559 = vadd.s32 %v558, 127
    %v560 = vshll.u32 %v559, 23
    %v561 = vor.u32 4788187, %v560
    %v562 = vand.u32 2147483647, %v561
    %v564 = vcvt.s32.f32 %v557
    %v565 = vmul.f32 %v564, %v562
    %v566 = vxor.u32 %v565, 2147483648
    %v567 = vsel %vm484, %v566, %v565
    %v568 = vsub.s32 4, %v544
    %v569 = vsel %vm484, %v568, %v544
    %v570 = vsel %vm483, %v481, %v567
    %v571 = vsel %vm483, 0, %v569
    %v572 = vcosq.f32.pop %v570
    %v573 = vsinq.f32.pop %v570
    %vm574 = vweird.f32 %v481
    %v575 = vadd.s32 %v571, 3
    %v576 = vand.u32 %v575, 3
    %vm577 = vcmp.lt.s32.totalorder %v576, 2
    %vm578 = vcmp.eq.s32.totalorder %v576, 0
    %v579 = vxor.u32 %v573, 2147483648
    %v580 = vsel %vm578, %v572, %v579
    %vm581 = vcmp.eq.s32.totalorder %v576, 2
    %v582 = vxor.u32 %v572, 2147483648
    %v583 = vsel %vm581, %v582, %v573
    %v584 = vsel %vm577, %v580, %v583
    %v585 = vsel %vm574, nan, %v584
    %587 = vrot.lane.b32.xlu0 %v585, 64
    %v588 = vpop.permute.xlu0 %587
    %vm590 = vcmask 648704
    %591 = vst.msk [vmem:[#allocation5] sm:$0x3] %vm590, %v588
    %v592 = vand.u32 2147483647, %v481
    %vm593 = vcmp.le.f32.partialorder %v592, 0.7853982
    %vm594 = vcmp.lt.s32.totalorder %v481, 0
    %v595 = vand.u32 %v481, 2139095040
    %v596 = vshrl.u32 %v595, 23
    %v597 = vsub.s32 %v596, 127
    %v598 = vand.u32 2147483647, %v481
    %v599 = vand.u32 %v598, 8388607
    %v600 = vor.u32 %v599, 8388608
    %v601 = vsub.s32 0, %v600
    %v602 = vadd.s32 %v597, 1
    %vm603 = vcmp.gt.s32.totalorder %v602, 0
    %v604 = vsel %vm603, %v602, 0
    %v605 = vshrl.u32 %v604, 5
    %v606 = vand.u32 %v604, 31
    %v607 = vsub.s32 32, %v606
    %v608 = vshrl.u32 683565275, %v607
    %v609 = vshll.u32 683565275, %v606
    %v610 = vshrl.u32 2475754826, %v607
    %v611 = vor.u32 %v609, %v610
    %v612 = vshll.u32 2475754826, %v606
    %v613 = vshrl.u32 2131351028, %v607
    %v614 = vor.u32 %v612, %v613
    %v615 = vshll.u32 2131351028, %v606
    %v616 = vshrl.u32 2102212464, %v607
    %v617 = vor.u32 %v615, %v616
    %v618 = vshll.u32 2102212464, %v606
    %v619 = vshrl.u32 920167782, %v607
    %v620 = vor.u32 %v618, %v619
    %v621 = vshll.u32 920167782, %v606
    %v622 = vshrl.u32 1326507024, %v607
    %v623 = vor.u32 %v621, %v622
    %vm624 = vcmp.lt.s32.totalorder %v605, 1
    %vm625 = vcmp.lt.s32.totalorder %v605, 2
    %vm626 = vcmp.lt.s32.totalorder %v605, 3
    %vm627 = vcmp.lt.s32.totalorder %v605, 4
    %v628 = vsel %vm624, %v608, %v611
    %v629 = vsel %vm627, %v617, 2102212464
    %v630 = vsel %vm626, %v614, %v629
    %v631 = vsel %vm625, %v628, %v630
    %v632 = vsel %vm624, %v611, %v614
    %v633 = vsel %vm627, %v620, 920167782
    %v634 = vsel %vm626, %v617, %v633
    %v635 = vsel %vm625, %v632, %v634
    %v636 = vsel %vm624, %v614, %v617
    %v637 = vsel %vm627, %v623, 1326507024
    %v638 = vsel %vm626, %v620, %v637
    %v639 = vsel %vm625, %v636, %v638
    %v640 = vshll.u32 %v600, 8
    %v641 = vmul.u32.u64.compose %v640, %v639
    %v642 = vextract.low.u32 %v641
    %v643 = vextract.high.u32 %v641
    %v644 = vmul.u32.u64.compose %v640, %v635
    %v645 = vextract.low.u32 %v644
    %v646 = vextract.high.u32 %v644
    %v647 = vmul.u32 %v640, %v631
    %v648 = vadd.s32 %v643, %v645
    %vm649 = vc.u32 %v643, %v645
    %v650 = vadd.s32 %v646, 1
    %v651 = vsel %vm649, %v650, %v646
    %v652 = vadd.s32 %v647, %v651
    %v653 = vadd.s32 %v652, 536870912
    %v654 = vshrl.u32 %v653, 30
    %v655 = vshll.u32 %v654, 30
    %v656 = vsub.s32 %v652, %v655
    %vm657 = vcmp.lt.s32.totalorder %v656, 0
    %v658 = vsub.s32 0, %v656
    %v659 = vsel %vm657, %v658, %v656
    %v660 = vclz %v659
    %v661 = vsub.s32 %v660, 2
    %vm662 = vcmp.gt.s32.totalorder 0, %v661
    %v663 = vsel %vm662, 0, %v661
    %v664 = vsub.s32 32, %v663
    %v665 = vshll.u32 %v656, %v663
    %v666 = vshrl.u32 %v648, %v664
    %v667 = vor.u32 %v665, %v666
    %v668 = vsub.s32 4294967266, %v663
    %v669 = vadd.s32 %v668, 127
    %v670 = vshll.u32 %v669, 23
    %v671 = vor.u32 4788187, %v670
    %v672 = vand.u32 2147483647, %v671
    %v674 = vcvt.s32.f32 %v667
    %v675 = vmul.f32 %v674, %v672
    %v676 = vxor.u32 %v675, 2147483648
    %v677 = vsel %vm594, %v676, %v675
    %v678 = vsub.s32 4, %v654
    %v679 = vsel %vm594, %v678, %v654
    %v680 = vsel %vm593, %v481, %v677
    %v681 = vsel %vm593, 0, %v679
    %v682 = vcosq.f32.pop %v680
    %v683 = vsinq.f32.pop %v680
    %vm684 = vweird.f32 %v481
    %v685 = vand.u32 %v681, 3
    %vm686 = vcmp.lt.s32.totalorder %v685, 2
    %vm687 = vcmp.eq.s32.totalorder %v685, 0
    %v688 = vxor.u32 %v683, 2147483648
    %v689 = vsel %vm687, %v682, %v688
    %vm690 = vcmp.eq.s32.totalorder %v685, 2
    %v691 = vxor.u32 %v682, 2147483648
    %v692 = vsel %vm690, %v691, %v683
    %v693 = vsel %vm686, %v689, %v692
    %v694 = vsel %vm684, nan, %v693
    %696 = vrot.lane.b32.xlu0 %v694, 80
    %v697 = vpop.permute.xlu0 %696
    %vm699 = vcmask 779904
    %700 = vst.msk [vmem:[#allocation5] sm:$0x3] %vm699, %v697
    %701 = vset.pattern.permute.xlu0 3
    %702 = vperm.xlu0 %701, %v24
    %v703 = vpop.permute.xlu0 %702
    %v705 = vmul.f32 %v703, %v35
    %v706 = vand.u32 2147483647, %v705
    %vm707 = vcmp.le.f32.partialorder %v706, 0.7853982
    %vm708 = vcmp.lt.s32.totalorder %v705, 0
    %v709 = vand.u32 %v705, 2139095040
    %v710 = vshrl.u32 %v709, 23
    %v711 = vsub.s32 %v710, 127
    %v712 = vand.u32 2147483647, %v705
    %v713 = vand.u32 %v712, 8388607
    %v714 = vor.u32 %v713, 8388608
    %v715 = vsub.s32 0, %v714
    %v716 = vadd.s32 %v711, 1
    %vm717 = vcmp.gt.s32.totalorder %v716, 0
    %v718 = vsel %vm717, %v716, 0
    %v719 = vshrl.u32 %v718, 5
    %v720 = vand.u32 %v718, 31
    %v721 = vsub.s32 32, %v720
    %v722 = vshrl.u32 683565275, %v721
    %v723 = vshll.u32 683565275, %v720
    %v724 = vshrl.u32 2475754826, %v721
    %v725 = vor.u32 %v723, %v724
    %v726 = vshll.u32 2475754826, %v720
    %v727 = vshrl.u32 2131351028, %v721
    %v728 = vor.u32 %v726, %v727
    %v729 = vshll.u32 2131351028, %v720
    %v730 = vshrl.u32 2102212464, %v721
    %v731 = vor.u32 %v729, %v730
    %v732 = vshll.u32 2102212464, %v720
    %v733 = vshrl.u32 920167782, %v721
    %v734 = vor.u32 %v732, %v733
    %v735 = vshll.u32 920167782, %v720
    %v736 = vshrl.u32 1326507024, %v721
    %v737 = vor.u32 %v735, %v736
    %vm738 = vcmp.lt.s32.totalorder %v719, 1
    %vm739 = vcmp.lt.s32.totalorder %v719, 2
    %vm740 = vcmp.lt.s32.totalorder %v719, 3
    %vm741 = vcmp.lt.s32.totalorder %v719, 4
    %v742 = vsel %vm738, %v722, %v725
    %v743 = vsel %vm741, %v731, 2102212464
    %v744 = vsel %vm740, %v728, %v743
    %v745 = vsel %vm739, %v742, %v744
    %v746 = vsel %vm738, %v725, %v728
    %v747 = vsel %vm741, %v734, 920167782
    %v748 = vsel %vm740, %v731, %v747
    %v749 = vsel %vm739, %v746, %v748
    %v750 = vsel %vm738, %v728, %v731
    %v751 = vsel %vm741, %v737, 1326507024
    %v752 = vsel %vm740, %v734, %v751
    %v753 = vsel %vm739, %v750, %v752
    %v754 = vshll.u32 %v714, 8
    %v755 = vmul.u32.u64.compose %v754, %v753
    %v756 = vextract.low.u32 %v755
    %v757 = vextract.high.u32 %v755
    %v758 = vmul.u32.u64.compose %v754, %v749
    %v759 = vextract.low.u32 %v758
    %v760 = vextract.high.u32 %v758
    %v761 = vmul.u32 %v754, %v745
    %v762 = vadd.s32 %v757, %v759
    %vm763 = vc.u32 %v757, %v759
    %v764 = vadd.s32 %v760, 1
    %v765 = vsel %vm763, %v764, %v760
    %v766 = vadd.s32 %v761, %v765
    %v767 = vadd.s32 %v766, 536870912
    %v768 = vshrl.u32 %v767, 30
    %v769 = vshll.u32 %v768, 30
    %v770 = vsub.s32 %v766, %v769
    %vm771 = vcmp.lt.s32.totalorder %v770, 0
    %v772 = vsub.s32 0, %v770
    %v773 = vsel %vm771, %v772, %v770
    %v774 = vclz %v773
    %v775 = vsub.s32 %v774, 2
    %vm776 = vcmp.gt.s32.totalorder 0, %v775
    %v777 = vsel %vm776, 0, %v775
    %v778 = vsub.s32 32, %v777
    %v779 = vshll.u32 %v770, %v777
    %v780 = vshrl.u32 %v762, %v778
    %v781 = vor.u32 %v779, %v780
    %v782 = vsub.s32 4294967266, %v777
    %v783 = vadd.s32 %v782, 127
    %v784 = vshll.u32 %v783, 23
    %v785 = vor.u32 4788187, %v784
    %v786 = vand.u32 2147483647, %v785
    %v788 = vcvt.s32.f32 %v781
    %v789 = vmul.f32 %v788, %v786
    %v790 = vxor.u32 %v789, 2147483648
    %v791 = vsel %vm708, %v790, %v789
    %v792 = vsub.s32 4, %v768
    %v793 = vsel %vm708, %v792, %v768
    %v794 = vsel %vm707, %v705, %v791
    %v795 = vsel %vm707, 0, %v793
    %v796 = vcosq.f32.pop %v794
    %v797 = vsinq.f32.pop %v794
    %vm798 = vweird.f32 %v705
    %v799 = vadd.s32 %v795, 3
    %v800 = vand.u32 %v799, 3
    %vm801 = vcmp.lt.s32.totalorder %v800, 2
    %vm802 = vcmp.eq.s32.totalorder %v800, 0
    %v803 = vxor.u32 %v797, 2147483648
    %v804 = vsel %vm802, %v796, %v803
    %vm805 = vcmp.eq.s32.totalorder %v800, 2
    %v806 = vxor.u32 %v796, 2147483648
    %v807 = vsel %vm805, %v806, %v797
    %v808 = vsel %vm801, %v804, %v807
    %v809 = vsel %vm798, nan, %v808
    %811 = vrot.lane.b32.xlu0 %v809, 96
    %v812 = vpop.permute.xlu0 %811
    %vm814 = vcmask 911104
    %815 = vst.msk [vmem:[#allocation5] sm:$0x3] %vm814, %v812
    %v816 = vand.u32 2147483647, %v705
    %vm817 = vcmp.le.f32.partialorder %v816, 0.7853982
    %vm818 = vcmp.lt.s32.totalorder %v705, 0
    %v819 = vand.u32 %v705, 2139095040
    %v820 = vshrl.u32 %v819, 23
    %v821 = vsub.s32 %v820, 127
    %v822 = vand.u32 2147483647, %v705
    %v823 = vand.u32 %v822, 8388607
    %v824 = vor.u32 %v823, 8388608
    %v825 = vsub.s32 0, %v824
    %v826 = vadd.s32 %v821, 1
    %vm827 = vcmp.gt.s32.totalorder %v826, 0
    %v828 = vsel %vm827, %v826, 0
    %v829 = vshrl.u32 %v828, 5
    %v830 = vand.u32 %v828, 31
    %v831 = vsub.s32 32, %v830
    %v832 = vshrl.u32 683565275, %v831
    %v833 = vshll.u32 683565275, %v830
    %v834 = vshrl.u32 2475754826, %v831
    %v835 = vor.u32 %v833, %v834
    %v836 = vshll.u32 2475754826, %v830
    %v837 = vshrl.u32 2131351028, %v831
    %v838 = vor.u32 %v836, %v837
    %v839 = vshll.u32 2131351028, %v830
    %v840 = vshrl.u32 2102212464, %v831
    %v841 = vor.u32 %v839, %v840
    %v842 = vshll.u32 2102212464, %v830
    %v843 = vshrl.u32 920167782, %v831
    %v844 = vor.u32 %v842, %v843
    %v845 = vshll.u32 920167782, %v830
    %v846 = vshrl.u32 1326507024, %v831
    %v847 = vor.u32 %v845, %v846
    %vm848 = vcmp.lt.s32.totalorder %v829, 1
    %vm849 = vcmp.lt.s32.totalorder %v829, 2
    %vm850 = vcmp.lt.s32.totalorder %v829, 3
    %vm851 = vcmp.lt.s32.totalorder %v829, 4
    %v852 = vsel %vm848, %v832, %v835
    %v853 = vsel %vm851, %v841, 2102212464
    %v854 = vsel %vm850, %v838, %v853
    %v855 = vsel %vm849, %v852, %v854
    %v856 = vsel %vm848, %v835, %v838
    %v857 = vsel %vm851, %v844, 920167782
    %v858 = vsel %vm850, %v841, %v857
    %v859 = vsel %vm849, %v856, %v858
    %v860 = vsel %vm848, %v838, %v841
    %v861 = vsel %vm851, %v847, 1326507024
    %v862 = vsel %vm850, %v844, %v861
    %v863 = vsel %vm849, %v860, %v862
    %v864 = vshll.u32 %v824, 8
    %v865 = vmul.u32.u64.compose %v864, %v863
    %v866 = vextract.low.u32 %v865
    %v867 = vextract.high.u32 %v865
    %v868 = vmul.u32.u64.compose %v864, %v859
    %v869 = vextract.low.u32 %v868
    %v870 = vextract.high.u32 %v868
    %v871 = vmul.u32 %v864, %v855
    %v872 = vadd.s32 %v867, %v869
    %vm873 = vc.u32 %v867, %v869
    %v874 = vadd.s32 %v870, 1
    %v875 = vsel %vm873, %v874, %v870
    %v876 = vadd.s32 %v871, %v875
    %v877 = vadd.s32 %v876, 536870912
    %v878 = vshrl.u32 %v877, 30
    %v879 = vshll.u32 %v878, 30
    %v880 = vsub.s32 %v876, %v879
    %vm881 = vcmp.lt.s32.totalorder %v880, 0
    %v882 = vsub.s32 0, %v880
    %v883 = vsel %vm881, %v882, %v880
    %v884 = vclz %v883
    %v885 = vsub.s32 %v884, 2
    %vm886 = vcmp.gt.s32.totalorder 0, %v885
    %v887 = vsel %vm886, 0, %v885
    %v888 = vsub.s32 32, %v887
    %v889 = vshll.u32 %v880, %v887
    %v890 = vshrl.u32 %v872, %v888
    %v891 = vor.u32 %v889, %v890
    %v892 = vsub.s32 4294967266, %v887
    %v893 = vadd.s32 %v892, 127
    %v894 = vshll.u32 %v893, 23
    %v895 = vor.u32 4788187, %v894
    %v896 = vand.u32 2147483647, %v895
    %v898 = vcvt.s32.f32 %v891
    %v899 = vmul.f32 %v898, %v896
    %v900 = vxor.u32 %v899, 2147483648
    %v901 = vsel %vm818, %v900, %v899
    %v902 = vsub.s32 4, %v878
    %v903 = vsel %vm818, %v902, %v878
    %v904 = vsel %vm817, %v705, %v901
    %v905 = vsel %vm817, 0, %v903
    %v906 = vcosq.f32.pop %v904
    %v907 = vsinq.f32.pop %v904
    %vm908 = vweird.f32 %v705
    %v909 = vand.u32 %v905, 3
    %vm910 = vcmp.lt.s32.totalorder %v909, 2
    %vm911 = vcmp.eq.s32.totalorder %v909, 0
    %v912 = vxor.u32 %v907, 2147483648
    %v913 = vsel %vm911, %v906, %v912
    %vm914 = vcmp.eq.s32.totalorder %v909, 2
    %v915 = vxor.u32 %v906, 2147483648
    %v916 = vsel %vm914, %v915, %v907
    %v917 = vsel %vm910, %v913, %v916
    %v918 = vsel %vm908, nan, %v917
    %920 = vrot.lane.b32.xlu0 %v918, 112
    %v921 = vpop.permute.xlu0 %920
    %vm923 = vcmask 1042304
    %924 = vst.msk [vmem:[#allocation5] sm:$0x3] %vm923, %v921
    // Predicated region
    $region14: #{tpu_custom_call.1} parent=1 // pred_check
      _
    $region15: #{tpu_custom_call.1} parent=1 // pred_check_branch
      %926 = sbr.rel (0) target = $region17
    $region16: #{tpu_custom_call.1} parent=1 // pred_region
      %s928 = ssub.s32 32, 32
      %929 = vsyncadd [#allocation4], %s928
      %s931 = sshll.u32 [#allocation5], 4
      %s932 = int_to_ptr.vmem [resolvable:$true] %s931
      %934 = dma.vmem_to_hbm [thread:$0]  %s932, 32, %s2, [#allocation4]
    $region17: #{tpu_custom_call.1} parent=1 // pred_fallthru
      _
    // Predicated region
    $region18: #{tpu_custom_call.1} parent=1 // pred_check
      _
    $region19: #{tpu_custom_call.1} parent=1 // pred_check_branch
      %936 = sbr.rel (0) target = $region21
    $region20: #{tpu_custom_call.1} parent=1 // pred_region
      %937 = dma.done [#allocation4], 32
    $region21: #{tpu_custom_call.1} parent=1 // pred_fallthru
      _
    %938 = vsyncpa [#allocation3], 1
    %939 = vsyncpa [#allocation4], 1

</llo_original>
